<compile_context>
chip_gen: v7x
topology: tpu7x:2x2x1
jax: 0.10.0
libtpu: 0.0.40
codegen_flags: <defaults>
</compile_context>

<pallas_src>
import jax
import jax.numpy as jnp
from jax.experimental import pallas as pl
from jax.experimental.pallas import tpu as pltpu

FEAT = 512
NUM_CLASSES = 16
PAD_CLASSES = ((NUM_CLASSES + 127) // 128) * 128   # lane-dense logits width
BN_EPS = 1e-5
L2_EPS = 1e-12
MAX_BATCH_BLOCK = 1024                             # safe on v7x (64 MiB phys VMEM)
VMEM_LIMIT = 32 * 1024 * 1024                      # lift v5e's 16 MiB default


def _round_up(x, m):
    return ((x + m - 1) // m) * m


# ---------------------------------------------------------------- kernels ---
def logits_kernel(emb_ref, w1_ref, b1_ref, wc_ref, bc_ref, out_ref):
    """normalize -> (BN1 folded) Linear+ReLU -> (BN2 folded) classifier."""
    x = emb_ref[...].astype(jnp.float32)                         # [bb, 512]
    sumsq = jnp.sum(x * x, axis=1, keepdims=True)                # f32 accumulation
    x = x * jax.lax.rsqrt(jnp.maximum(sumsq, L2_EPS * L2_EPS))   # == x / max(||x||, eps)

    # Linear(512,512) with BN1 pre-folded; bf16 MXU, f32 accumulation.
    h = jnp.dot(x.astype(jnp.bfloat16), w1_ref[...],
                preferred_element_type=jnp.float32)
    h = jnp.maximum(h + b1_ref[...], 0.0)                        # bias + ReLU

    # classifier Linear(512, C) with BN2 pre-folded; output lane-padded to 128.
    logits = jnp.dot(h.astype(jnp.bfloat16), wc_ref[...],
                     preferred_element_type=jnp.float32)
    out_ref[...] = logits + bc_ref[...]


def embed_kernel(emb_ref, w1_ref, b1_ref, bn2_ref, out_ref):
    """normalize -> (BN1 folded) Linear+ReLU -> BN2 scale/shift."""
    x = emb_ref[...].astype(jnp.float32)
    sumsq = jnp.sum(x * x, axis=1, keepdims=True)
    x = x * jax.lax.rsqrt(jnp.maximum(sumsq, L2_EPS * L2_EPS))

    h = jnp.dot(x.astype(jnp.bfloat16), w1_ref[...],
                preferred_element_type=jnp.float32)
    h = jnp.maximum(h + b1_ref[...], 0.0)

    s2 = bn2_ref[0:1, :]                                         # 2-D slices, no relayout
    t2 = bn2_ref[1:2, :]
    out_ref[...] = (h * s2 + t2).astype(out_ref.dtype)


# ---------------------------------------------------------------- wrapper ---
def face_recognition_head(embeddings, prep, return_embeddings=False):
    """embeddings: [B, 512] (backbone output); prep: prepare_params().

    Returns:
      return_embeddings=True : processed embeddings [B, 512] in bfloat16.
      return_embeddings=False: lane-padded logits [B, PAD_CLASSES] float32;
                               valid classes are [:, :NUM_CLASSES] (slice lazily
                               at the consumer to avoid an extra HBM copy).
    """
    B = embeddings.shape[0]
    x = embeddings.astype(jnp.bfloat16)          # halve activation HBM traffic

    # Batch block: single full-batch block for small B; otherwise >=2 grid steps
    # (128-row aligned) so v7x megacore can shard the "parallel" axis.
    if B < 256:
        bb = B
    else:
        bb = min(MAX_BATCH_BLOCK, _round_up(pl.cdiv(B, 2), 128))
    Bp = _round_up(B, bb)
    if Bp != B:
        x = jnp.pad(x, ((0, Bp - B), (0, 0)))    # zero rows are benign through normalize
    grid = (Bp // bb,)

    row_blk = lambda shape: pl.BlockSpec(shape, lambda i: (i, 0))   # per-block rows
    rep_blk = lambda shape: pl.BlockSpec(shape, lambda i: (0, 0))   # VMEM-resident
    cparams = pltpu.CompilerParams(dimension_semantics=("parallel",),
                                   vmem_limit_bytes=VMEM_LIMIT)

    if return_embeddings:
        out = pl.pallas_call(
            embed_kernel,
            out_shape=jax.ShapeDtypeStruct((Bp, FEAT), jnp.bfloat16),
            grid=grid,
            in_specs=[
                row_blk((bb, FEAT)),          # embeddings (bf16)
                rep_blk((FEAT, FEAT)),        # W1' (BN1-folded, bf16)
                rep_blk((1, FEAT)),           # b1'
                rep_blk((2, FEAT)),           # BN2 [scale; shift]
            ],
            out_specs=row_blk((bb, FEAT)),
            compiler_params=cparams,
        )(x, prep["w1"], prep["b1"], prep["bn2"])
        return out[:B] if Bp != B else out

    out = pl.pallas_call(
        logits_kernel,
        out_shape=jax.ShapeDtypeStruct((Bp, PAD_CLASSES), jnp.float32),
        grid=grid,
        in_specs=[
            row_blk((bb, FEAT)),              # embeddings (bf16)
            rep_blk((FEAT, FEAT)),            # W1' (BN1-folded, bf16)
            rep_blk((1, FEAT)),               # b1'
            rep_blk((FEAT, PAD_CLASSES)),     # Wc' (BN2-folded, lane-padded, bf16)
            rep_blk((1, PAD_CLASSES)),        # bc'
        ],
        out_specs=row_blk((bb, PAD_CLASSES)),
        compiler_params=cparams,
    )(x, prep["w1"], prep["b1"], prep["wc"], prep["bc"])
    return out[:B] if Bp != B else out


# ------------------------------------------------------------------ params --
def xavier_uniform(key, fan_in, fan_out):
    # matches nn.init.xavier_uniform_ on a (fan_out, fan_in) weight; stored
    # pre-transposed as (in, out) so the kernel computes x @ W.
    limit = jnp.sqrt(6.0 / (fan_in + fan_out))
    return jax.random.uniform(key, (fan_in, fan_out), jnp.float32,
                              minval=-limit, maxval=limit)


def init_params(key):
    """Raw parameters in PyTorch (eval) semantics."""
    k1, k2, k3, k4, k5, k6 = jax.random.split(key, 6)
    # BatchNorm1d defaults: gamma=1, beta=0, running_mean=0, running_var=1.
    # Perturb running stats so the BN actually does work.
    bn1 = jnp.stack([
        jnp.ones((FEAT,), jnp.float32),
        jnp.zeros((FEAT,), jnp.float32),
        0.01 * jax.random.normal(k3, (FEAT,), jnp.float32),
        1.0 + 0.1 * jax.random.uniform(k5, (FEAT,), jnp.float32),
    ])
    bn2 = jnp.stack([
        jnp.ones((FEAT,), jnp.float32),
        jnp.zeros((FEAT,), jnp.float32),
        0.01 * jax.random.normal(k4, (FEAT,), jnp.float32),
        1.0 + 0.1 * jax.random.uniform(k6, (FEAT,), jnp.float32),
    ])
    return {
        "bn1": bn1,
        "w1": xavier_uniform(k1, FEAT, FEAT),
        "b1": jnp.zeros((1, FEAT), jnp.float32),
        "bn2": bn2,
        "wc": xavier_uniform(k2, FEAT, NUM_CLASSES),
        "bc": jnp.zeros((1, NUM_CLASSES), jnp.float32),
    }


def prepare_params(raw):
    """Fold BN1 into W1/b1, BN2 into scale/shift (+ into the classifier for the
    logits path), lane-pad the classifier, and cast weights to bf16."""
    g1, be1, m1, v1 = raw["bn1"]
    s1 = g1 * jax.lax.rsqrt(v1 + BN_EPS)
    t1 = be1 - m1 * s1
    w1f = s1[:, None] * raw["w1"]                 # diag(s1) @ W1
    b1f = raw["b1"] + t1[None, :] @ raw["w1"]     # b1 + t1 @ W1

    g2, be2, m2, v2 = raw["bn2"]
    s2 = g2 * jax.lax.rsqrt(v2 + BN_EPS)
    t2 = be2 - m2 * s2
    wcf = s2[:, None] * raw["wc"]                 # diag(s2) @ Wc
    bcf = raw["bc"] + t2[None, :] @ raw["wc"]     # bc + t2 @ Wc

    pad = PAD_CLASSES - NUM_CLASSES
    wcp = jnp.pad(wcf, ((0, 0), (0, pad)))
    bcp = jnp.pad(bcf, ((0, 0), (0, pad)))

    return {
        "w1": w1f.astype(jnp.bfloat16),
        "b1": b1f.astype(jnp.float32),
        "wc": wcp.astype(jnp.bfloat16),
        "bc": bcp.astype(jnp.float32),
        "bn2": jnp.stack([s2, t2]).astype(jnp.float32),
    }


# -------------------------------------------------------------- references --
def reference_head_prepared(embeddings, prep, return_embeddings=False):
    """Pure-JAX reference using the same folded/bf16 math as the kernel."""
    x = embeddings.astype(jnp.bfloat16).astype(jnp.float32)
    sumsq = jnp.sum(x * x, axis=1, keepdims=True)
    x = x * jax.lax.rsqrt(jnp.maximum(sumsq, L2_EPS * L2_EPS))
    h = jnp.dot(x.astype(jnp.bfloat16), prep["w1"],
                preferred_element_type=jnp.float32)
    h = jnp.maximum(h + prep["b1"], 0.0)
    if return_embeddings:
        return (h * prep["bn2"][0:1, :] + prep["bn2"][1:2, :]).astype(jnp.bfloat16)
    logits = jnp.dot(h.astype(jnp.bfloat16), prep["wc"],
                     preferred_element_type=jnp.float32)
    return logits + prep["bc"]                    # lane-padded


def reference_head_f32(embeddings, raw, return_embeddings=False):
    """Un-folded, full-precision reference (original PyTorch eval semantics)."""
    x = embeddings.astype(jnp.float32)
    norm = jnp.sqrt(jnp.sum(x * x, axis=1, keepdims=True))
    x = x / jnp.maximum(norm, L2_EPS)
    g1, b1, m1, v1 = raw["bn1"]
    x = (x - m1) * jax.lax.rsqrt(v1 + BN_EPS) * g1 + b1
    h = x @ raw["w1"] + raw["b1"]
    h = jnp.maximum(h, 0.0)
    g2, b2, m2, v2 = raw["bn2"]
    h = (h - m2) * jax.lax.rsqrt(v2 + BN_EPS) * g2 + b2
    if return_embeddings:
        return h
    return h @ raw["wc"] + raw["bc"]


if __name__ == "__main__":
    key = jax.random.PRNGKey(0)
    kp, kx = jax.random.split(key)
    raw = init_params(kp)
    prep = prepare_params(raw)

    B = 8
    # Stand-in for backbone(images): a [B, 512] embedding batch.
    embeddings = jax.random.normal(kx, (B, FEAT), jnp.float32)

    logits_pad = face_recognition_head(embeddings, prep)
    proc = face_recognition_head(embeddings, prep, return_embeddings=True)
    jax.block_until_ready(logits_pad)
    jax.block_until_ready(proc)

    assert logits_pad.shape == (B, PAD_CLASSES)
    assert logits_pad.dtype == jnp.float32
    assert proc.shape == (B, FEAT)
    assert proc.dtype == jnp.bfloat16

    logits = logits_pad[:, :NUM_CLASSES]          # consumer-side lazy slice

    # Tight check: kernel vs identical folded/bf16 math in pure JAX.
    ref_l = reference_head_prepared(embeddings, prep)
    ref_p = reference_head_prepared(embeddings, prep, return_embeddings=True)
    assert jnp.allclose(logits_pad, ref_l, atol=5e-3, rtol=5e-3)
    assert jnp.allclose(proc.astype(jnp.float32), ref_p.astype(jnp.float32),
                        atol=5e-3, rtol=5e-3)

    # Loose check: folded bf16 kernel vs original un-folded f32 semantics.
    f32_l = reference_head_f32(embeddings, raw)
    f32_p = reference_head_f32(embeddings, raw, return_embeddings=True)
    assert jnp.allclose(logits, f32_l, atol=2e-2, rtol=2e-2)
    assert jnp.allclose(proc.astype(jnp.float32), f32_p, atol=2e-2, rtol=2e-2)

    print("KERNEL_OK")
</pallas_src>

<mosaic_0001>
module attributes {stable_mosaic.version = 11 : i64} {
  func.func @logits_kernel(%arg0: i32, %arg1: memref<8x512xbf16, #tpu.memory_space<vmem>>, %arg2: memref<512x512xbf16, #tpu.memory_space<vmem>>, %arg3: memref<1x512xf32, #tpu.memory_space<vmem>>, %arg4: memref<512x128xbf16, #tpu.memory_space<vmem>>, %arg5: memref<1x128xf32, #tpu.memory_space<vmem>>, %arg6: memref<8x128xf32, #tpu.memory_space<vmem>>) attributes {dimension_semantics = [#tpu.dimension_semantics<parallel>], iteration_bounds = array<i64: 1>, scalar_prefetch = 0 : i64, scratch_operands = 0 : i64, tpu.core_type = #tpu.core_type<tc>, window_params = [{transform_indices = @transform_0, window_bounds = array<i64: 8, 512>}, {pipeline_mode = #tpu.pipeline_mode<synchronous>, transform_indices = @transform_1, window_bounds = array<i64: 512, 512>}, {pipeline_mode = #tpu.pipeline_mode<synchronous>, transform_indices = @transform_2, window_bounds = array<i64: 1, 512>}, {pipeline_mode = #tpu.pipeline_mode<synchronous>, transform_indices = @transform_3, window_bounds = array<i64: 512, 128>}, {pipeline_mode = #tpu.pipeline_mode<synchronous>, transform_indices = @transform_4, window_bounds = array<i64: 1, 128>}, {transform_indices = @transform_5, window_bounds = array<i64: 8, 128>}]} {
    %c0 = arith.constant 0 : index
    %c0_0 = arith.constant 0 : index
    %0 = vector.load %arg1[%c0, %c0_0] : memref<8x512xbf16, #tpu.memory_space<vmem>>, vector<8x512xbf16>
    %1 = arith.extf %0 : vector<8x512xbf16> to vector<8x512xf32>
    %2 = arith.mulf %1, %1 : vector<8x512xf32>
    %cst = arith.constant dense<0.000000e+00> : vector<8xf32>
    %3 = vector.multi_reduction <add>, %2, %cst [1] : vector<8x512xf32> to vector<8xf32>
    %4 = vector.shape_cast %3 : vector<8xf32> to vector<8x1xf32>
    %cst_1 = arith.constant 1.000000e-24 : f32
    %5 = vector.broadcast %cst_1 : f32 to vector<8x1xf32>
    %6 = arith.maximumf %4, %5 : vector<8x1xf32>
    %7 = math.rsqrt %6 : vector<8x1xf32>
    %8 = vector.broadcast %7 : vector<8x1xf32> to vector<8x512xf32>
    %9 = arith.mulf %1, %8 : vector<8x512xf32>
    %10 = arith.truncf %9 : vector<8x512xf32> to vector<8x512xbf16>
    %c0_2 = arith.constant 0 : index
    %c0_3 = arith.constant 0 : index
    %11 = vector.load %arg2[%c0_2, %c0_3] : memref<512x512xbf16, #tpu.memory_space<vmem>>, vector<512x512xbf16>
    %cst_4 = arith.constant dense<0.000000e+00> : vector<8x512xf32>
    %12 = tpu.matmul %10, %11, %cst_4 {dimension_numbers = #tpu.dot_dimension_numbers<[1], [0], [0], [1], [0, 0, 1, 1], [], []>} : vector<8x512xbf16>, vector<512x512xbf16>, vector<8x512xf32> -> vector<8x512xf32>
    %c0_5 = arith.constant 0 : index
    %c0_6 = arith.constant 0 : index
    %13 = vector.load %arg3[%c0_5, %c0_6] : memref<1x512xf32, #tpu.memory_space<vmem>>, vector<1x512xf32>
    %14 = vector.broadcast %13 : vector<1x512xf32> to vector<8x512xf32>
    %15 = arith.addf %12, %14 : vector<8x512xf32>
    %cst_7 = arith.constant 0.000000e+00 : f32
    %16 = vector.broadcast %cst_7 : f32 to vector<8x512xf32>
    %17 = arith.maximumf %15, %16 : vector<8x512xf32>
    %18 = arith.truncf %17 : vector<8x512xf32> to vector<8x512xbf16>
    %c0_8 = arith.constant 0 : index
    %c0_9 = arith.constant 0 : index
    %19 = vector.load %arg4[%c0_8, %c0_9] : memref<512x128xbf16, #tpu.memory_space<vmem>>, vector<512x128xbf16>
    %cst_10 = arith.constant dense<0.000000e+00> : vector<8x128xf32>
    %20 = tpu.matmul %18, %19, %cst_10 {dimension_numbers = #tpu.dot_dimension_numbers<[1], [0], [0], [1], [0, 0, 1, 1], [], []>} : vector<8x512xbf16>, vector<512x128xbf16>, vector<8x128xf32> -> vector<8x128xf32>
    %c0_11 = arith.constant 0 : index
    %c0_12 = arith.constant 0 : index
    %21 = vector.load %arg5[%c0_11, %c0_12] : memref<1x128xf32, #tpu.memory_space<vmem>>, vector<1x128xf32>
    %22 = vector.broadcast %21 : vector<1x128xf32> to vector<8x128xf32>
    %23 = arith.addf %20, %22 : vector<8x128xf32>
    %c0_13 = arith.constant 0 : index
    %c0_14 = arith.constant 0 : index
    %24 = vector.load %arg6[%c0_13, %c0_14] : memref<8x128xf32, #tpu.memory_space<vmem>>, vector<8x128xf32>
    tpu.vector_store %arg6[%c0_13, %c0_14], %23 {strides = array<i32>} : memref<8x128xf32, #tpu.memory_space<vmem>>, vector<8x128xf32>,
    return
  }
  func.func @transform_0(%arg0: i32) -> (i32, i32) {
    %c0_i32 = arith.constant 0 : i32
    %c0_i32_0 = arith.constant 0 : i32
    return %arg0, %c0_i32 : i32, i32
  }
  func.func @transform_1(%arg0: i32) -> (i32, i32) {
    %c0_i32 = arith.constant 0 : i32
    %c0_i32_0 = arith.constant 0 : i32
    %c0_i32_1 = arith.constant 0 : i32
    return %c0_i32, %c0_i32_0 : i32, i32
  }
  func.func @transform_2(%arg0: i32) -> (i32, i32) {
    %c0_i32 = arith.constant 0 : i32
    %c0_i32_0 = arith.constant 0 : i32
    %c0_i32_1 = arith.constant 0 : i32
    return %c0_i32, %c0_i32_0 : i32, i32
  }
  func.func @transform_3(%arg0: i32) -> (i32, i32) {
    %c0_i32 = arith.constant 0 : i32
    %c0_i32_0 = arith.constant 0 : i32
    %c0_i32_1 = arith.constant 0 : i32
    return %c0_i32, %c0_i32_0 : i32, i32
  }
  func.func @transform_4(%arg0: i32) -> (i32, i32) {
    %c0_i32 = arith.constant 0 : i32
    %c0_i32_0 = arith.constant 0 : i32
    %c0_i32_1 = arith.constant 0 : i32
    return %c0_i32, %c0_i32_0 : i32, i32
  }
  func.func @transform_5(%arg0: i32) -> (i32, i32) {
    %c0_i32 = arith.constant 0 : i32
    %c0_i32_0 = arith.constant 0 : i32
    return %arg0, %c0_i32 : i32, i32
  }
}

</mosaic_0001>

<llo_original>
// kernel: tpu_custom_call.1
$region0: #{tpu_custom_call.1}
  #allocation0 [shape = 'u32[]', space=smem, size = 0x4, offset = 0x4, fixed_abs, tag = 'smem constant byte address 0x4 - core index']
  #allocation1 [shape = 'u32[144,128]{1,0:T(1,128)}', space=vmem, size = 0x12000, scoped, tag = 'internal scratch']
  %s0 = inlined_call_operand.hbm [shape: bf16[8,512], index: 0, kind: input, shape index: {}]
  %s1 = inlined_call_operand.hbm [shape: bf16[512,512], index: 1, kind: input, shape index: {}]
  %s2 = inlined_call_operand.vmem [shape: f32[1,512], index: 2, kind: input, shape index: {}]
  %s3 = inlined_call_operand.hbm [shape: bf16[512,128], index: 3, kind: input, shape index: {}]
  %s4 = inlined_call_operand.vmem [shape: f32[1,128], index: 4, kind: input, shape index: {}]
  %s5 = inlined_call_operand.hbm [shape: f32[8,128], index: 5, kind: output, shape index: {}]
  %s6 = sld [smem:[#allocation0]]
  $region42: #{tpu_custom_call.1} parent=0
    _
  %s8 = ssub.s32 1, %s6
  %s9 = scalar_select 0, %s8, %s6
  $region1: #{tpu_custom_call.1} parent=0
    #allocation2 [shape = 'u8[8192]{0}', space=vmem, size = 0x2000, scoped, tag = 'input window, operand 0, single buffered']
    #allocation3 [shape = 's32[1]{0}', space=sflag, size = 0x4, scoped, tag = 'scoped memory for tpu_custom_call.1']
    #allocation4 [shape = 's32[1]{0}', space=sflag, size = 0x4, scoped, tag = 'scoped memory for tpu_custom_call.1']
    #allocation5 [shape = 'u8[524288]{0}', space=vmem, size = 0x80000, scoped, tag = 'input window, operand 1, single buffered']
    #allocation6 [shape = 's32[1]{0}', space=sflag, size = 0x4, scoped, tag = 'scoped memory for tpu_custom_call.1']
    #allocation7 [shape = 'u8[131072]{0}', space=vmem, size = 0x20000, scoped, tag = 'input window, operand 3, single buffered']
    #allocation8 [shape = 'u8[4096]{0}', space=vmem, size = 0x1000, scoped, tag = 'output window, operand 0, single buffered']
    %10 = vsyncpa [#allocation3], 0
    %11 = vsyncpa [#allocation6], 0
    %12 = vsyncpa [#allocation4], 0
    // Predicated region
    $region2: #{tpu_custom_call.1} parent=1 // pred_check
      _
    $region3: #{tpu_custom_call.1} parent=1 // pred_check_branch
      %14 = sbr.rel (0) target = $region5
    $region4: #{tpu_custom_call.1} parent=1 // pred_region
      %s16 = ssub.s32 256, 256
      %17 = vsyncadd [#allocation3], %s16
      %s19 = sshll.u32 [#allocation2], 4
      %s20 = int_to_ptr.vmem [resolvable:$true] %s19
      %22 = dma.hbm_to_vmem [thread:$0]  %s0, 256, %s20, [#allocation3]
    $region5: #{tpu_custom_call.1} parent=1 // pred_fallthru
      _
    // Predicated region
    $region6: #{tpu_custom_call.1} parent=1 // pred_check
      _
    $region7: #{tpu_custom_call.1} parent=1 // pred_check_branch
      %24 = sbr.rel (0) target = $region9
    $region8: #{tpu_custom_call.1} parent=1 // pred_region
      %s26 = ssub.s32 16384, 16384
      %27 = vsyncadd [#allocation6], %s26
      %s28 = sshll.u32 [#allocation5], 4
      %s29 = int_to_ptr.vmem [resolvable:$true] %s28
      %34 = dma.hbm_to_vmem [thread:$0]  %s1, 16384, %s29, [#allocation6], 256, 256, 16
    $region9: #{tpu_custom_call.1} parent=1 // pred_fallthru
      _
    // Predicated region
    $region10: #{tpu_custom_call.1} parent=1 // pred_check
      _
    $region11: #{tpu_custom_call.1} parent=1 // pred_check_branch
      %36 = sbr.rel (0) target = $region13
    $region12: #{tpu_custom_call.1} parent=1 // pred_region
      _
    $region13: #{tpu_custom_call.1} parent=1 // pred_fallthru
      _
    // Predicated region
    $region14: #{tpu_custom_call.1} parent=1 // pred_check
      _
    $region15: #{tpu_custom_call.1} parent=1 // pred_check_branch
      %38 = sbr.rel (0) target = $region17
    $region16: #{tpu_custom_call.1} parent=1 // pred_region
      %s40 = ssub.s32 4096, 4096
      %41 = vsyncadd [#allocation6], %s40
      %s42 = sshll.u32 [#allocation7], 4
      %s43 = int_to_ptr.vmem [resolvable:$true] %s42
      %48 = dma.hbm_to_vmem [thread:$0]  %s3, 4096, %s43, [#allocation6], 64, 64, 4
    $region17: #{tpu_custom_call.1} parent=1 // pred_fallthru
      _
    // Predicated region
    $region18: #{tpu_custom_call.1} parent=1 // pred_check
      _
    $region19: #{tpu_custom_call.1} parent=1 // pred_check_branch
      %50 = sbr.rel (0) target = $region21
    $region20: #{tpu_custom_call.1} parent=1 // pred_region
      _
    $region21: #{tpu_custom_call.1} parent=1 // pred_fallthru
      _
    // Predicated region
    $region22: #{tpu_custom_call.1} parent=1 // pred_check
      _
    $region23: #{tpu_custom_call.1} parent=1 // pred_check_branch
      %52 = sbr.rel (0) target = $region25
    $region24: #{tpu_custom_call.1} parent=1 // pred_region
      %53 = dma.done [#allocation3], 256
    $region25: #{tpu_custom_call.1} parent=1 // pred_fallthru
      _
    // Predicated region
    $region26: #{tpu_custom_call.1} parent=1 // pred_check
      _
    $region27: #{tpu_custom_call.1} parent=1 // pred_check_branch
      %55 = sbr.rel (0) target = $region29
    $region28: #{tpu_custom_call.1} parent=1 // pred_region
      %56 = dma.done [#allocation6], 16384
    $region29: #{tpu_custom_call.1} parent=1 // pred_fallthru
      _
    // Predicated region
    $region30: #{tpu_custom_call.1} parent=1 // pred_check
      _
    $region31: #{tpu_custom_call.1} parent=1 // pred_check_branch
      %58 = sbr.rel (0) target = $region33
    $region32: #{tpu_custom_call.1} parent=1 // pred_region
      %59 = dma.done [#allocation6], 4096
    $region33: #{tpu_custom_call.1} parent=1 // pred_fallthru
      _
    %v61 = vld [vmem:[#allocation2] sm:$0xff]
    %v62 = vld [vmem:[#allocation2 + $0x8] sm:$0xff]
    %v63 = vunpack.c.l.bf16 %v61
    %v64 = vunpack.c.h.bf16 %v61
    %v65 = vunpack.c.l.bf16 %v62
    %v66 = vunpack.c.h.bf16 %v62
    %v67 = vmul.f32 %v63, %v63
    %v68 = vmul.f32 %v64, %v64
    %v69 = vmul.f32 %v65, %v65
    %v70 = vmul.f32 %v66, %v66
    %v71 = vadd.f32 %v67, %v68
    %v72 = vadd.f32 %v71, %v69
    %v73 = vadd.f32 %v72, %v70
    %74 = vadd.xlane.f32.xlu0 %v73
    %v75 = vpop.xlane.xlu0 %74
    %v76 = vmax.f32 %v75, 1e-24
    %v77 = vrsqrt.pop %v76
    %v78 = vmul.f32 %v63, %v77
    %v79 = vmul.f32 %v64, %v77
    %v80 = vmul.f32 %v65, %v77
    %v81 = vmul.f32 %v66, %v77
    %v82 = vpack.c.bf16 %v78, %v78
    %v83 = vpack.c.bf16 %v79, %v79
    %v84 = vpack.c.bf16 %v80, %v80
    %v85 = vpack.c.bf16 %v81, %v81
    %v86 = vld [vmem:[#allocation5] sm:$0xff]
    %v87 = vld [vmem:[#allocation5 + $0x8] sm:$0xff]
    %v88 = vld [vmem:[#allocation5 + $0x10] sm:$0xff]
    %v89 = vld [vmem:[#allocation5 + $0x18] sm:$0xff]
    %v90 = vld [vmem:[#allocation5 + $0x20] sm:$0xff]
    %v91 = vld [vmem:[#allocation5 + $0x28] sm:$0xff]
    %v92 = vld [vmem:[#allocation5 + $0x30] sm:$0xff]
    %v93 = vld [vmem:[#allocation5 + $0x38] sm:$0xff]
    %v94 = vld [vmem:[#allocation5 + $0x40] sm:$0xff]
    %v95 = vld [vmem:[#allocation5 + $0x48] sm:$0xff]
    %v96 = vld [vmem:[#allocation5 + $0x50] sm:$0xff]
    %v97 = vld [vmem:[#allocation5 + $0x58] sm:$0xff]
    %v98 = vld [vmem:[#allocation5 + $0x60] sm:$0xff]
    %v99 = vld [vmem:[#allocation5 + $0x68] sm:$0xff]
    %v100 = vld [vmem:[#allocation5 + $0x70] sm:$0xff]
    %v101 = vld [vmem:[#allocation5 + $0x78] sm:$0xff]
    %v102 = vld [vmem:[#allocation5 + $0x80] sm:$0xff]
    %v103 = vld [vmem:[#allocation5 + $0x88] sm:$0xff]
    %v104 = vld [vmem:[#allocation5 + $0x90] sm:$0xff]
    %v105 = vld [vmem:[#allocation5 + $0x98] sm:$0xff]
    %v106 = vld [vmem:[#allocation5 + $0xa0] sm:$0xff]
    %v107 = vld [vmem:[#allocation5 + $0xa8] sm:$0xff]
    %v108 = vld [vmem:[#allocation5 + $0xb0] sm:$0xff]
    %v109 = vld [vmem:[#allocation5 + $0xb8] sm:$0xff]
    %v110 = vld [vmem:[#allocation5 + $0xc0] sm:$0xff]
    %v111 = vld [vmem:[#allocation5 + $0xc8] sm:$0xff]
    %v112 = vld [vmem:[#allocation5 + $0xd0] sm:$0xff]
    %v113 = vld [vmem:[#allocation5 + $0xd8] sm:$0xff]
    %v114 = vld [vmem:[#allocation5 + $0xe0] sm:$0xff]
    %v115 = vld [vmem:[#allocation5 + $0xe8] sm:$0xff]
    %v116 = vld [vmem:[#allocation5 + $0xf0] sm:$0xff]
    %v117 = vld [vmem:[#allocation5 + $0xf8] sm:$0xff]
    %v118 = vld [vmem:[#allocation5 + $0x100] sm:$0xff]
    %v119 = vld [vmem:[#allocation5 + $0x108] sm:$0xff]
    %v120 = vld [vmem:[#allocation5 + $0x110] sm:$0xff]
    %v121 = vld [vmem:[#allocation5 + $0x118] sm:$0xff]
    %v122 = vld [vmem:[#allocation5 + $0x120] sm:$0xff]
    %v123 = vld [vmem:[#allocation5 + $0x128] sm:$0xff]
    %v124 = vld [vmem:[#allocation5 + $0x130] sm:$0xff]
    %v125 = vld [vmem:[#allocation5 + $0x138] sm:$0xff]
    %v126 = vld [vmem:[#allocation5 + $0x140] sm:$0xff]
    %v127 = vld [vmem:[#allocation5 + $0x148] sm:$0xff]
    %v128 = vld [vmem:[#allocation5 + $0x150] sm:$0xff]
    %v129 = vld [vmem:[#allocation5 + $0x158] sm:$0xff]
    %v130 = vld [vmem:[#allocation5 + $0x160] sm:$0xff]
    %v131 = vld [vmem:[#allocation5 + $0x168] sm:$0xff]
    %v132 = vld [vmem:[#allocation5 + $0x170] sm:$0xff]
    %v133 = vld [vmem:[#allocation5 + $0x178] sm:$0xff]
    %v134 = vld [vmem:[#allocation5 + $0x180] sm:$0xff]
    %v135 = vld [vmem:[#allocation5 + $0x188] sm:$0xff]
    %v136 = vld [vmem:[#allocation5 + $0x190] sm:$0xff]
    %v137 = vld [vmem:[#allocation5 + $0x198] sm:$0xff]
    %v138 = vld [vmem:[#allocation5 + $0x1a0] sm:$0xff]
    %v139 = vld [vmem:[#allocation5 + $0x1a8] sm:$0xff]
    %v140 = vld [vmem:[#allocation5 + $0x1b0] sm:$0xff]
    %v141 = vld [vmem:[#allocation5 + $0x1b8] sm:$0xff]
    %v142 = vld [vmem:[#allocation5 + $0x1c0] sm:$0xff]
    %v143 = vld [vmem:[#allocation5 + $0x1c8] sm:$0xff]
    %v144 = vld [vmem:[#allocation5 + $0x1d0] sm:$0xff]
    %v145 = vld [vmem:[#allocation5 + $0x1d8] sm:$0xff]
    %v146 = vld [vmem:[#allocation5 + $0x1e0] sm:$0xff]
    %v147 = vld [vmem:[#allocation5 + $0x1e8] sm:$0xff]
    %v148 = vld [vmem:[#allocation5 + $0x1f0] sm:$0xff]
    %v149 = vld [vmem:[#allocation5 + $0x1f8] sm:$0xff]
    %v150 = vld [vmem:[#allocation5 + $0x200] sm:$0xff]
    %v151 = vld [vmem:[#allocation5 + $0x208] sm:$0xff]
    %v152 = vld [vmem:[#allocation5 + $0x210] sm:$0xff]
    %v153 = vld [vmem:[#allocation5 + $0x218] sm:$0xff]
    %v154 = vld [vmem:[#allocation5 + $0x220] sm:$0xff]
    %v155 = vld [vmem:[#allocation5 + $0x228] sm:$0xff]
    %v156 = vld [vmem:[#allocation5 + $0x230] sm:$0xff]
    %v157 = vld [vmem:[#allocation5 + $0x238] sm:$0xff]
    %v158 = vld [vmem:[#allocation5 + $0x240] sm:$0xff]
    %v159 = vld [vmem:[#allocation5 + $0x248] sm:$0xff]
    %v160 = vld [vmem:[#allocation5 + $0x250] sm:$0xff]
    %v161 = vld [vmem:[#allocation5 + $0x258] sm:$0xff]
    %v162 = vld [vmem:[#allocation5 + $0x260] sm:$0xff]
    %v163 = vld [vmem:[#allocation5 + $0x268] sm:$0xff]
    %v164 = vld [vmem:[#allocation5 + $0x270] sm:$0xff]
    %v165 = vld [vmem:[#allocation5 + $0x278] sm:$0xff]
    %v166 = vld [vmem:[#allocation5 + $0x280] sm:$0xff]
    %v167 = vld [vmem:[#allocation5 + $0x288] sm:$0xff]
    %v168 = vld [vmem:[#allocation5 + $0x290] sm:$0xff]
    %v169 = vld [vmem:[#allocation5 + $0x298] sm:$0xff]
    %v170 = vld [vmem:[#allocation5 + $0x2a0] sm:$0xff]
    %v171 = vld [vmem:[#allocation5 + $0x2a8] sm:$0xff]
    %v172 = vld [vmem:[#allocation5 + $0x2b0] sm:$0xff]
    %v173 = vld [vmem:[#allocation5 + $0x2b8] sm:$0xff]
    %v174 = vld [vmem:[#allocation5 + $0x2c0] sm:$0xff]
    %v175 = vld [vmem:[#allocation5 + $0x2c8] sm:$0xff]
    %v176 = vld [vmem:[#allocation5 + $0x2d0] sm:$0xff]
    %v177 = vld [vmem:[#allocation5 + $0x2d8] sm:$0xff]
    %v178 = vld [vmem:[#allocation5 + $0x2e0] sm:$0xff]
    %v179 = vld [vmem:[#allocation5 + $0x2e8] sm:$0xff]
    %v180 = vld [vmem:[#allocation5 + $0x2f0] sm:$0xff]
    %v181 = vld [vmem:[#allocation5 + $0x2f8] sm:$0xff]
    %v182 = vld [vmem:[#allocation5 + $0x300] sm:$0xff]
    %v183 = vld [vmem:[#allocation5 + $0x308] sm:$0xff]
    %v184 = vld [vmem:[#allocation5 + $0x310] sm:$0xff]
    %v185 = vld [vmem:[#allocation5 + $0x318] sm:$0xff]
    %v186 = vld [vmem:[#allocation5 + $0x320] sm:$0xff]
    %v187 = vld [vmem:[#allocation5 + $0x328] sm:$0xff]
    %v188 = vld [vmem:[#allocation5 + $0x330] sm:$0xff]
    %v189 = vld [vmem:[#allocation5 + $0x338] sm:$0xff]
    %v190 = vld [vmem:[#allocation5 + $0x340] sm:$0xff]
    %v191 = vld [vmem:[#allocation5 + $0x348] sm:$0xff]
    %v192 = vld [vmem:[#allocation5 + $0x350] sm:$0xff]
    %v193 = vld [vmem:[#allocation5 + $0x358] sm:$0xff]
    %v194 = vld [vmem:[#allocation5 + $0x360] sm:$0xff]
    %v195 = vld [vmem:[#allocation5 + $0x368] sm:$0xff]
    %v196 = vld [vmem:[#allocation5 + $0x370] sm:$0xff]
    %v197 = vld [vmem:[#allocation5 + $0x378] sm:$0xff]
    %v198 = vld [vmem:[#allocation5 + $0x380] sm:$0xff]
    %v199 = vld [vmem:[#allocation5 + $0x388] sm:$0xff]
    %v200 = vld [vmem:[#allocation5 + $0x390] sm:$0xff]
    %v201 = vld [vmem:[#allocation5 + $0x398] sm:$0xff]
    %v202 = vld [vmem:[#allocation5 + $0x3a0] sm:$0xff]
    %v203 = vld [vmem:[#allocation5 + $0x3a8] sm:$0xff]
    %v204 = vld [vmem:[#allocation5 + $0x3b0] sm:$0xff]
    %v205 = vld [vmem:[#allocation5 + $0x3b8] sm:$0xff]
    %v206 = vld [vmem:[#allocation5 + $0x3c0] sm:$0xff]
    %v207 = vld [vmem:[#allocation5 + $0x3c8] sm:$0xff]
    %v208 = vld [vmem:[#allocation5 + $0x3d0] sm:$0xff]
    %v209 = vld [vmem:[#allocation5 + $0x3d8] sm:$0xff]
    %v210 = vld [vmem:[#allocation5 + $0x3e0] sm:$0xff]
    %v211 = vld [vmem:[#allocation5 + $0x3e8] sm:$0xff]
    %v212 = vld [vmem:[#allocation5 + $0x3f0] sm:$0xff]
    %v213 = vld [vmem:[#allocation5 + $0x3f8] sm:$0xff]
    %v214 = vld [vmem:[%s2] sm:$0xf]
    %v216 = vlaneseq
    %v217 = vshrl.u32 %v216, 7
    %v218 = vsub.s32 0, %v217
    %v219 = vrot.slane %v214, %v218
    %v220 = vlaneseq
    %v221 = vshrl.u32 %v220, 7
    %v222 = vsub.s32 1, %v221
    %v223 = vrot.slane %v214, %v222
    %v224 = vlaneseq
    %v225 = vshrl.u32 %v224, 7
    %v226 = vsub.s32 2, %v225
    %v227 = vrot.slane %v214, %v226
    %v228 = vlaneseq
    %v229 = vshrl.u32 %v228, 7
    %v230 = vsub.s32 3, %v229
    %v231 = vrot.slane %v214, %v230
    %v364 = vunpack.c.l.b16 %v86
    %v365 = vunpack.c.h.b16 %v86
    %v366 = vunpack.c.l.b16 %v87
    %v367 = vunpack.c.h.b16 %v87
    %v368 = vunpack.c.l.b16 %v88
    %v369 = vunpack.c.h.b16 %v88
    %v370 = vunpack.c.l.b16 %v89
    %v371 = vunpack.c.h.b16 %v89
    %v372 = vunpack.c.l.b16 %v90
    %v373 = vunpack.c.h.b16 %v90
    %v374 = vunpack.c.l.b16 %v91
    %v375 = vunpack.c.h.b16 %v91
    %v376 = vunpack.c.l.b16 %v92
    %v377 = vunpack.c.h.b16 %v92
    %v378 = vunpack.c.l.b16 %v93
    %v379 = vunpack.c.h.b16 %v93
    %v380 = vunpack.c.l.b16 %v94
    %v381 = vunpack.c.h.b16 %v94
    %v382 = vunpack.c.l.b16 %v95
    %v383 = vunpack.c.h.b16 %v95
    %v384 = vunpack.c.l.b16 %v96
    %v385 = vunpack.c.h.b16 %v96
    %v386 = vunpack.c.l.b16 %v97
    %v387 = vunpack.c.h.b16 %v97
    %v388 = vunpack.c.l.b16 %v98
    %v389 = vunpack.c.h.b16 %v98
    %v390 = vunpack.c.l.b16 %v99
    %v391 = vunpack.c.h.b16 %v99
    %v392 = vunpack.c.l.b16 %v100
    %v393 = vunpack.c.h.b16 %v100
    %v394 = vunpack.c.l.b16 %v101
    %v395 = vunpack.c.h.b16 %v101
    %v396 = vunpack.c.l.b16 %v102
    %v397 = vunpack.c.h.b16 %v102
    %v398 = vunpack.c.l.b16 %v103
    %v399 = vunpack.c.h.b16 %v103
    %v400 = vunpack.c.l.b16 %v104
    %v401 = vunpack.c.h.b16 %v104
    %v402 = vunpack.c.l.b16 %v105
    %v403 = vunpack.c.h.b16 %v105
    %v404 = vunpack.c.l.b16 %v106
    %v405 = vunpack.c.h.b16 %v106
    %v406 = vunpack.c.l.b16 %v107
    %v407 = vunpack.c.h.b16 %v107
    %v408 = vunpack.c.l.b16 %v108
    %v409 = vunpack.c.h.b16 %v108
    %v410 = vunpack.c.l.b16 %v109
    %v411 = vunpack.c.h.b16 %v109
    %v412 = vunpack.c.l.b16 %v110
    %v413 = vunpack.c.h.b16 %v110
    %v414 = vunpack.c.l.b16 %v111
    %v415 = vunpack.c.h.b16 %v111
    %v416 = vunpack.c.l.b16 %v112
    %v417 = vunpack.c.h.b16 %v112
    %v418 = vunpack.c.l.b16 %v113
    %v419 = vunpack.c.h.b16 %v113
    %v420 = vunpack.c.l.b16 %v114
    %v421 = vunpack.c.h.b16 %v114
    %v422 = vunpack.c.l.b16 %v115
    %v423 = vunpack.c.h.b16 %v115
    %v424 = vunpack.c.l.b16 %v116
    %v425 = vunpack.c.h.b16 %v116
    %v426 = vunpack.c.l.b16 %v117
    %v427 = vunpack.c.h.b16 %v117
    %v428 = vunpack.c.l.b16 %v118
    %v429 = vunpack.c.h.b16 %v118
    %v430 = vunpack.c.l.b16 %v119
    %v431 = vunpack.c.h.b16 %v119
    %v432 = vunpack.c.l.b16 %v120
    %v433 = vunpack.c.h.b16 %v120
    %v434 = vunpack.c.l.b16 %v121
    %v435 = vunpack.c.h.b16 %v121
    %v436 = vunpack.c.l.b16 %v122
    %v437 = vunpack.c.h.b16 %v122
    %v438 = vunpack.c.l.b16 %v123
    %v439 = vunpack.c.h.b16 %v123
    %v440 = vunpack.c.l.b16 %v124
    %v441 = vunpack.c.h.b16 %v124
    %v442 = vunpack.c.l.b16 %v125
    %v443 = vunpack.c.h.b16 %v125
    %v444 = vunpack.c.l.b16 %v126
    %v445 = vunpack.c.h.b16 %v126
    %v446 = vunpack.c.l.b16 %v127
    %v447 = vunpack.c.h.b16 %v127
    %v448 = vunpack.c.l.b16 %v128
    %v449 = vunpack.c.h.b16 %v128
    %v450 = vunpack.c.l.b16 %v129
    %v451 = vunpack.c.h.b16 %v129
    %v452 = vunpack.c.l.b16 %v130
    %v453 = vunpack.c.h.b16 %v130
    %v454 = vunpack.c.l.b16 %v131
    %v455 = vunpack.c.h.b16 %v131
    %v456 = vunpack.c.l.b16 %v132
    %v457 = vunpack.c.h.b16 %v132
    %v458 = vunpack.c.l.b16 %v133
    %v459 = vunpack.c.h.b16 %v133
    %v460 = vunpack.c.l.b16 %v134
    %v461 = vunpack.c.h.b16 %v134
    %v462 = vunpack.c.l.b16 %v135
    %v463 = vunpack.c.h.b16 %v135
    %v464 = vunpack.c.l.b16 %v136
    %v465 = vunpack.c.h.b16 %v136
    %v466 = vunpack.c.l.b16 %v137
    %v467 = vunpack.c.h.b16 %v137
    %v468 = vunpack.c.l.b16 %v138
    %v469 = vunpack.c.h.b16 %v138
    %v470 = vunpack.c.l.b16 %v139
    %v471 = vunpack.c.h.b16 %v139
    %v472 = vunpack.c.l.b16 %v140
    %v473 = vunpack.c.h.b16 %v140
    %v474 = vunpack.c.l.b16 %v141
    %v475 = vunpack.c.h.b16 %v141
    %v476 = vunpack.c.l.b16 %v142
    %v477 = vunpack.c.h.b16 %v142
    %v478 = vunpack.c.l.b16 %v143
    %v479 = vunpack.c.h.b16 %v143
    %v480 = vunpack.c.l.b16 %v144
    %v481 = vunpack.c.h.b16 %v144
    %v482 = vunpack.c.l.b16 %v145
    %v483 = vunpack.c.h.b16 %v145
    %v484 = vunpack.c.l.b16 %v146
    %v485 = vunpack.c.h.b16 %v146
    %v486 = vunpack.c.l.b16 %v147
    %v487 = vunpack.c.h.b16 %v147
    %v488 = vunpack.c.l.b16 %v148
    %v489 = vunpack.c.h.b16 %v148
    %v490 = vunpack.c.l.b16 %v149
    %v491 = vunpack.c.h.b16 %v149
    %v492 = vunpack.c.l.b16 %v150
    %v493 = vunpack.c.h.b16 %v150
    %v494 = vunpack.c.l.b16 %v151
    %v495 = vunpack.c.h.b16 %v151
    %v496 = vunpack.c.l.b16 %v152
    %v497 = vunpack.c.h.b16 %v152
    %v498 = vunpack.c.l.b16 %v153
    %v499 = vunpack.c.h.b16 %v153
    %v500 = vunpack.c.l.b16 %v154
    %v501 = vunpack.c.h.b16 %v154
    %v502 = vunpack.c.l.b16 %v155
    %v503 = vunpack.c.h.b16 %v155
    %v504 = vunpack.c.l.b16 %v156
    %v505 = vunpack.c.h.b16 %v156
    %v506 = vunpack.c.l.b16 %v157
    %v507 = vunpack.c.h.b16 %v157
    %v508 = vunpack.c.l.b16 %v158
    %v509 = vunpack.c.h.b16 %v158
    %v510 = vunpack.c.l.b16 %v159
    %v511 = vunpack.c.h.b16 %v159
    %v512 = vunpack.c.l.b16 %v160
    %v513 = vunpack.c.h.b16 %v160
    %v514 = vunpack.c.l.b16 %v161
    %v515 = vunpack.c.h.b16 %v161
    %v516 = vunpack.c.l.b16 %v162
    %v517 = vunpack.c.h.b16 %v162
    %v518 = vunpack.c.l.b16 %v163
    %v519 = vunpack.c.h.b16 %v163
    %v520 = vunpack.c.l.b16 %v164
    %v521 = vunpack.c.h.b16 %v164
    %v522 = vunpack.c.l.b16 %v165
    %v523 = vunpack.c.h.b16 %v165
    %v524 = vunpack.c.l.b16 %v166
    %v525 = vunpack.c.h.b16 %v166
    %v526 = vunpack.c.l.b16 %v167
    %v527 = vunpack.c.h.b16 %v167
    %v528 = vunpack.c.l.b16 %v168
    %v529 = vunpack.c.h.b16 %v168
    %v530 = vunpack.c.l.b16 %v169
    %v531 = vunpack.c.h.b16 %v169
    %v532 = vunpack.c.l.b16 %v170
    %v533 = vunpack.c.h.b16 %v170
    %v534 = vunpack.c.l.b16 %v171
    %v535 = vunpack.c.h.b16 %v171
    %v536 = vunpack.c.l.b16 %v172
    %v537 = vunpack.c.h.b16 %v172
    %v538 = vunpack.c.l.b16 %v173
    %v539 = vunpack.c.h.b16 %v173
    %v540 = vunpack.c.l.b16 %v174
    %v541 = vunpack.c.h.b16 %v174
    %v542 = vunpack.c.l.b16 %v175
    %v543 = vunpack.c.h.b16 %v175
    %v544 = vunpack.c.l.b16 %v176
    %v545 = vunpack.c.h.b16 %v176
    %v546 = vunpack.c.l.b16 %v177
    %v547 = vunpack.c.h.b16 %v177
    %v548 = vunpack.c.l.b16 %v178
    %v549 = vunpack.c.h.b16 %v178
    %v550 = vunpack.c.l.b16 %v179
    %v551 = vunpack.c.h.b16 %v179
    %v552 = vunpack.c.l.b16 %v180
    %v553 = vunpack.c.h.b16 %v180
    %v554 = vunpack.c.l.b16 %v181
    %v555 = vunpack.c.h.b16 %v181
    %v556 = vunpack.c.l.b16 %v182
    %v557 = vunpack.c.h.b16 %v182
    %v558 = vunpack.c.l.b16 %v183
    %v559 = vunpack.c.h.b16 %v183
    %v560 = vunpack.c.l.b16 %v184
    %v561 = vunpack.c.h.b16 %v184
    %v562 = vunpack.c.l.b16 %v185
    %v563 = vunpack.c.h.b16 %v185
    %v564 = vunpack.c.l.b16 %v186
    %v565 = vunpack.c.h.b16 %v186
    %v566 = vunpack.c.l.b16 %v187
    %v567 = vunpack.c.h.b16 %v187
    %v568 = vunpack.c.l.b16 %v188
    %v569 = vunpack.c.h.b16 %v188
    %v570 = vunpack.c.l.b16 %v189
    %v571 = vunpack.c.h.b16 %v189
    %v572 = vunpack.c.l.b16 %v190
    %v573 = vunpack.c.h.b16 %v190
    %v574 = vunpack.c.l.b16 %v191
    %v575 = vunpack.c.h.b16 %v191
    %v576 = vunpack.c.l.b16 %v192
    %v577 = vunpack.c.h.b16 %v192
    %v578 = vunpack.c.l.b16 %v193
    %v579 = vunpack.c.h.b16 %v193
    %v580 = vunpack.c.l.b16 %v194
    %v581 = vunpack.c.h.b16 %v194
    %v582 = vunpack.c.l.b16 %v195
    %v583 = vunpack.c.h.b16 %v195
    %v584 = vunpack.c.l.b16 %v196
    %v585 = vunpack.c.h.b16 %v196
    %v586 = vunpack.c.l.b16 %v197
    %v587 = vunpack.c.h.b16 %v197
    %v588 = vunpack.c.l.b16 %v198
    %v589 = vunpack.c.h.b16 %v198
    %v590 = vunpack.c.l.b16 %v199
    %v591 = vunpack.c.h.b16 %v199
    %v592 = vunpack.c.l.b16 %v200
    %v593 = vunpack.c.h.b16 %v200
    %v594 = vunpack.c.l.b16 %v201
    %v595 = vunpack.c.h.b16 %v201
    %v596 = vunpack.c.l.b16 %v202
    %v597 = vunpack.c.h.b16 %v202
    %v598 = vunpack.c.l.b16 %v203
    %v599 = vunpack.c.h.b16 %v203
    %v600 = vunpack.c.l.b16 %v204
    %v601 = vunpack.c.h.b16 %v204
    %v602 = vunpack.c.l.b16 %v205
    %v603 = vunpack.c.h.b16 %v205
    %v604 = vunpack.c.l.b16 %v206
    %v605 = vunpack.c.h.b16 %v206
    %v606 = vunpack.c.l.b16 %v207
    %v607 = vunpack.c.h.b16 %v207
    %v608 = vunpack.c.l.b16 %v208
    %v609 = vunpack.c.h.b16 %v208
    %v610 = vunpack.c.l.b16 %v209
    %v611 = vunpack.c.h.b16 %v209
    %v612 = vunpack.c.l.b16 %v210
    %v613 = vunpack.c.h.b16 %v210
    %v614 = vunpack.c.l.b16 %v211
    %v615 = vunpack.c.h.b16 %v211
    %v616 = vunpack.c.l.b16 %v212
    %v617 = vunpack.c.h.b16 %v212
    %v618 = vunpack.c.l.b16 %v213
    %v619 = vunpack.c.h.b16 %v213
    %v620 = vpack.c.b16 %v368, %v364
    %v621 = vpack.c.b16 %v369, %v365
    %v622 = vpack.c.b16 %v370, %v366
    %v623 = vpack.c.b16 %v371, %v367
    %v624 = vpack.c.b16 %v376, %v372
    %v625 = vpack.c.b16 %v377, %v373
    %v626 = vpack.c.b16 %v378, %v374
    %v627 = vpack.c.b16 %v379, %v375
    %v628 = vpack.c.b16 %v384, %v380
    %v629 = vpack.c.b16 %v385, %v381
    %v630 = vpack.c.b16 %v386, %v382
    %v631 = vpack.c.b16 %v387, %v383
    %v632 = vpack.c.b16 %v392, %v388
    %v633 = vpack.c.b16 %v393, %v389
    %v634 = vpack.c.b16 %v394, %v390
    %v635 = vpack.c.b16 %v395, %v391
    %v636 = vpack.c.b16 %v400, %v396
    %v637 = vpack.c.b16 %v401, %v397
    %v638 = vpack.c.b16 %v402, %v398
    %v639 = vpack.c.b16 %v403, %v399
    %v640 = vpack.c.b16 %v408, %v404
    %v641 = vpack.c.b16 %v409, %v405
    %v642 = vpack.c.b16 %v410, %v406
    %v643 = vpack.c.b16 %v411, %v407
    %v644 = vpack.c.b16 %v416, %v412
    %v645 = vpack.c.b16 %v417, %v413
    %v646 = vpack.c.b16 %v418, %v414
    %v647 = vpack.c.b16 %v419, %v415
    %v648 = vpack.c.b16 %v424, %v420
    %v649 = vpack.c.b16 %v425, %v421
    %v650 = vpack.c.b16 %v426, %v422
    %v651 = vpack.c.b16 %v427, %v423
    %v652 = vpack.c.b16 %v432, %v428
    %v653 = vpack.c.b16 %v433, %v429
    %v654 = vpack.c.b16 %v434, %v430
    %v655 = vpack.c.b16 %v435, %v431
    %v656 = vpack.c.b16 %v440, %v436
    %v657 = vpack.c.b16 %v441, %v437
    %v658 = vpack.c.b16 %v442, %v438
    %v659 = vpack.c.b16 %v443, %v439
    %v660 = vpack.c.b16 %v448, %v444
    %v661 = vpack.c.b16 %v449, %v445
    %v662 = vpack.c.b16 %v450, %v446
    %v663 = vpack.c.b16 %v451, %v447
    %v664 = vpack.c.b16 %v456, %v452
    %v665 = vpack.c.b16 %v457, %v453
    %v666 = vpack.c.b16 %v458, %v454
    %v667 = vpack.c.b16 %v459, %v455
    %v668 = vpack.c.b16 %v464, %v460
    %v669 = vpack.c.b16 %v465, %v461
    %v670 = vpack.c.b16 %v466, %v462
    %v671 = vpack.c.b16 %v467, %v463
    %v672 = vpack.c.b16 %v472, %v468
    %v673 = vpack.c.b16 %v473, %v469
    %v674 = vpack.c.b16 %v474, %v470
    %v675 = vpack.c.b16 %v475, %v471
    %v676 = vpack.c.b16 %v480, %v476
    %v677 = vpack.c.b16 %v481, %v477
    %v678 = vpack.c.b16 %v482, %v478
    %v679 = vpack.c.b16 %v483, %v479
    %v680 = vpack.c.b16 %v488, %v484
    %v681 = vpack.c.b16 %v489, %v485
    %v682 = vpack.c.b16 %v490, %v486
    %v683 = vpack.c.b16 %v491, %v487
    %v684 = vpack.c.b16 %v496, %v492
    %v685 = vpack.c.b16 %v497, %v493
    %v686 = vpack.c.b16 %v498, %v494
    %v687 = vpack.c.b16 %v499, %v495
    %v688 = vpack.c.b16 %v504, %v500
    %v689 = vpack.c.b16 %v505, %v501
    %v690 = vpack.c.b16 %v506, %v502
    %v691 = vpack.c.b16 %v507, %v503
    %v692 = vpack.c.b16 %v512, %v508
    %v693 = vpack.c.b16 %v513, %v509
    %v694 = vpack.c.b16 %v514, %v510
    %v695 = vpack.c.b16 %v515, %v511
    %v696 = vpack.c.b16 %v520, %v516
    %v697 = vpack.c.b16 %v521, %v517
    %v698 = vpack.c.b16 %v522, %v518
    %v699 = vpack.c.b16 %v523, %v519
    %v700 = vpack.c.b16 %v528, %v524
    %v701 = vpack.c.b16 %v529, %v525
    %v702 = vpack.c.b16 %v530, %v526
    %v703 = vpack.c.b16 %v531, %v527
    %v704 = vpack.c.b16 %v536, %v532
    %v705 = vpack.c.b16 %v537, %v533
    %v706 = vpack.c.b16 %v538, %v534
    %v707 = vpack.c.b16 %v539, %v535
    %v708 = vpack.c.b16 %v544, %v540
    %v709 = vpack.c.b16 %v545, %v541
    %v710 = vpack.c.b16 %v546, %v542
    %v711 = vpack.c.b16 %v547, %v543
    %v712 = vpack.c.b16 %v552, %v548
    %v713 = vpack.c.b16 %v553, %v549
    %v714 = vpack.c.b16 %v554, %v550
    %v715 = vpack.c.b16 %v555, %v551
    %v716 = vpack.c.b16 %v560, %v556
    %v717 = vpack.c.b16 %v561, %v557
    %v718 = vpack.c.b16 %v562, %v558
    %v719 = vpack.c.b16 %v563, %v559
    %v720 = vpack.c.b16 %v568, %v564
    %v721 = vpack.c.b16 %v569, %v565
    %v722 = vpack.c.b16 %v570, %v566
    %v723 = vpack.c.b16 %v571, %v567
    %v724 = vpack.c.b16 %v576, %v572
    %v725 = vpack.c.b16 %v577, %v573
    %v726 = vpack.c.b16 %v578, %v574
    %v727 = vpack.c.b16 %v579, %v575
    %v728 = vpack.c.b16 %v584, %v580
    %v729 = vpack.c.b16 %v585, %v581
    %v730 = vpack.c.b16 %v586, %v582
    %v731 = vpack.c.b16 %v587, %v583
    %v732 = vpack.c.b16 %v592, %v588
    %v733 = vpack.c.b16 %v593, %v589
    %v734 = vpack.c.b16 %v594, %v590
    %v735 = vpack.c.b16 %v595, %v591
    %v736 = vpack.c.b16 %v600, %v596
    %v737 = vpack.c.b16 %v601, %v597
    %v738 = vpack.c.b16 %v602, %v598
    %v739 = vpack.c.b16 %v603, %v599
    %v740 = vpack.c.b16 %v608, %v604
    %v741 = vpack.c.b16 %v609, %v605
    %v742 = vpack.c.b16 %v610, %v606
    %v743 = vpack.c.b16 %v611, %v607
    %v744 = vpack.c.b16 %v616, %v612
    %v745 = vpack.c.b16 %v617, %v613
    %v746 = vpack.c.b16 %v618, %v614
    %v747 = vpack.c.b16 %v619, %v615
    %876 = vmatprep.subr.bf16.mxu0 %v621
    %877 = vmatpush1.bf16.msra.mxu0 %v620
    %878 = vmatprep.subr.bf16.mxu0 %v625
    %879 = vmatpush1.bf16.msra.mxu0 %v624
    %880 = vmatprep.subr.bf16.mxu0 %v629
    %881 = vmatpush1.bf16.msra.mxu0 %v628
    %882 = vmatprep.subr.bf16.mxu0 %v633
    %883 = vmatpush1.bf16.msra.mxu0 %v632
    %884 = vmatprep.subr.bf16.mxu0 %v637
    %885 = vmatpush1.bf16.msra.mxu0 %v636
    %886 = vmatprep.subr.bf16.mxu0 %v641
    %887 = vmatpush1.bf16.msra.mxu0 %v640
    %888 = vmatprep.subr.bf16.mxu0 %v645
    %889 = vmatpush1.bf16.msra.mxu0 %v644
    %890 = vmatprep.subr.bf16.mxu0 %v649
    %891 = vmatpush1.bf16.msra.mxu0 %v648
    %892 = vmatprep.subr.bf16.mxu0 %v653
    %893 = vmatpush1.bf16.msra.mxu0 %v652
    %894 = vmatprep.subr.bf16.mxu0 %v657
    %895 = vmatpush1.bf16.msra.mxu0 %v656
    %896 = vmatprep.subr.bf16.mxu0 %v661
    %897 = vmatpush1.bf16.msra.mxu0 %v660
    %898 = vmatprep.subr.bf16.mxu0 %v665
    %899 = vmatpush1.bf16.msra.mxu0 %v664
    %900 = vmatprep.subr.bf16.mxu0 %v669
    %901 = vmatpush1.bf16.msra.mxu0 %v668
    %902 = vmatprep.subr.bf16.mxu0 %v673
    %903 = vmatpush1.bf16.msra.mxu0 %v672
    %904 = vmatprep.subr.bf16.mxu0 %v677
    %905 = vmatpush1.bf16.msra.mxu0 %v676
    %906 = vmatprep.subr.bf16.mxu0 %v681
    %907 = vmatpush1.bf16.msra.mxu0 %v680
    %908 = vmatprep.mubr.bf16.mxu0 %v83
    %909 = vmatmul.mubr.bf16.gmra.mrb[0].mxu0 %v82
    %v910 = vpop.f32.mrb[0].mxu0
    %v911 = vadd.f32 %v219, %v910
    %v912 = vpop.f32.mrb[0].mxu0
    %v913 = vadd.f32 %v223, %v912
    %v914 = vpop.f32.mrb[0].mxu0
    %v915 = vpop.f32.mrb[0].mxu0
    %916 = vdwg.mxu0
    %917 = vmatprep.subr.bf16.mxu0 %v685
    %918 = vmatpush1.bf16.msra.mxu0 %v684
    %919 = vmatprep.subr.bf16.mxu0 %v689
    %920 = vmatpush1.bf16.msra.mxu0 %v688
    %921 = vmatprep.subr.bf16.mxu0 %v693
    %922 = vmatpush1.bf16.msra.mxu0 %v692
    %923 = vmatprep.subr.bf16.mxu0 %v697
    %924 = vmatpush1.bf16.msra.mxu0 %v696
    %925 = vmatprep.subr.bf16.mxu0 %v701
    %926 = vmatpush1.bf16.msra.mxu0 %v700
    %927 = vmatprep.subr.bf16.mxu0 %v705
    %928 = vmatpush1.bf16.msra.mxu0 %v704
    %929 = vmatprep.subr.bf16.mxu0 %v709
    %930 = vmatpush1.bf16.msra.mxu0 %v708
    %931 = vmatprep.subr.bf16.mxu0 %v713
    %932 = vmatpush1.bf16.msra.mxu0 %v712
    %933 = vmatprep.subr.bf16.mxu0 %v717
    %934 = vmatpush1.bf16.msra.mxu0 %v716
    %935 = vmatprep.subr.bf16.mxu0 %v721
    %936 = vmatpush1.bf16.msra.mxu0 %v720
    %937 = vmatprep.subr.bf16.mxu0 %v725
    %938 = vmatpush1.bf16.msra.mxu0 %v724
    %939 = vmatprep.subr.bf16.mxu0 %v729
    %940 = vmatpush1.bf16.msra.mxu0 %v728
    %941 = vmatprep.subr.bf16.mxu0 %v733
    %942 = vmatpush1.bf16.msra.mxu0 %v732
    %943 = vmatprep.subr.bf16.mxu0 %v737
    %944 = vmatpush1.bf16.msra.mxu0 %v736
    %945 = vmatprep.subr.bf16.mxu0 %v741
    %946 = vmatpush1.bf16.msra.mxu0 %v740
    %947 = vmatprep.subr.bf16.mxu0 %v745
    %948 = vmatpush1.bf16.msra.mxu0 %v744
    %949 = vmatprep.mubr.bf16.mxu0 %v85
    %950 = vmatmul.mubr.bf16.gmra.mrb[0].mxu0 %v84
    %v951 = vpop.f32.mrb[0].mxu0
    %v952 = vadd.f32 %v911, %v951
    %v953 = vpop.f32.mrb[0].mxu0
    %v954 = vadd.f32 %v913, %v953
    %v955 = vpop.f32.mrb[0].mxu0
    %v956 = vpop.f32.mrb[0].mxu0
    %957 = vdwg.mxu0
    %958 = vmatprep.subr.bf16.mxu0 %v623
    %959 = vmatpush1.bf16.msra.mxu0 %v622
    %960 = vmatprep.subr.bf16.mxu0 %v627
    %961 = vmatpush1.bf16.msra.mxu0 %v626
    %962 = vmatprep.subr.bf16.mxu0 %v631
    %963 = vmatpush1.bf16.msra.mxu0 %v630
    %964 = vmatprep.subr.bf16.mxu0 %v635
    %965 = vmatpush1.bf16.msra.mxu0 %v634
    %966 = vmatprep.subr.bf16.mxu0 %v639
    %967 = vmatpush1.bf16.msra.mxu0 %v638
    %968 = vmatprep.subr.bf16.mxu0 %v643
    %969 = vmatpush1.bf16.msra.mxu0 %v642
    %970 = vmatprep.subr.bf16.mxu0 %v647
    %971 = vmatpush1.bf16.msra.mxu0 %v646
    %972 = vmatprep.subr.bf16.mxu0 %v651
    %973 = vmatpush1.bf16.msra.mxu0 %v650
    %974 = vmatprep.subr.bf16.mxu0 %v655
    %975 = vmatpush1.bf16.msra.mxu0 %v654
    %976 = vmatprep.subr.bf16.mxu0 %v659
    %977 = vmatpush1.bf16.msra.mxu0 %v658
    %978 = vmatprep.subr.bf16.mxu0 %v663
    %979 = vmatpush1.bf16.msra.mxu0 %v662
    %980 = vmatprep.subr.bf16.mxu0 %v667
    %981 = vmatpush1.bf16.msra.mxu0 %v666
    %982 = vmatprep.subr.bf16.mxu0 %v671
    %983 = vmatpush1.bf16.msra.mxu0 %v670
    %984 = vmatprep.subr.bf16.mxu0 %v675
    %985 = vmatpush1.bf16.msra.mxu0 %v674
    %986 = vmatprep.subr.bf16.mxu0 %v679
    %987 = vmatpush1.bf16.msra.mxu0 %v678
    %988 = vmatprep.subr.bf16.mxu0 %v683
    %989 = vmatpush1.bf16.msra.mxu0 %v682
    %990 = vmatprep.mubr.bf16.mxu0 %v83
    %991 = vmatmul.mubr.bf16.gmra.mrb[0].mxu0 %v82
    %v992 = vpop.f32.mrb[0].mxu0
    %v993 = vadd.f32 %v227, %v992
    %v994 = vpop.f32.mrb[0].mxu0
    %v995 = vadd.f32 %v231, %v994
    %v996 = vpop.f32.mrb[0].mxu0
    %v997 = vpop.f32.mrb[0].mxu0
    %998 = vdwg.mxu0
    %999 = vmatprep.subr.bf16.mxu0 %v687
    %1000 = vmatpush1.bf16.msra.mxu0 %v686
    %1001 = vmatprep.subr.bf16.mxu0 %v691
    %1002 = vmatpush1.bf16.msra.mxu0 %v690
    %1003 = vmatprep.subr.bf16.mxu0 %v695
    %1004 = vmatpush1.bf16.msra.mxu0 %v694
    %1005 = vmatprep.subr.bf16.mxu0 %v699
    %1006 = vmatpush1.bf16.msra.mxu0 %v698
    %1007 = vmatprep.subr.bf16.mxu0 %v703
    %1008 = vmatpush1.bf16.msra.mxu0 %v702
    %1009 = vmatprep.subr.bf16.mxu0 %v707
    %1010 = vmatpush1.bf16.msra.mxu0 %v706
    %1011 = vmatprep.subr.bf16.mxu0 %v711
    %1012 = vmatpush1.bf16.msra.mxu0 %v710
    %1013 = vmatprep.subr.bf16.mxu0 %v715
    %1014 = vmatpush1.bf16.msra.mxu0 %v714
    %1015 = vmatprep.subr.bf16.mxu0 %v719
    %1016 = vmatpush1.bf16.msra.mxu0 %v718
    %1017 = vmatprep.subr.bf16.mxu0 %v723
    %1018 = vmatpush1.bf16.msra.mxu0 %v722
    %1019 = vmatprep.subr.bf16.mxu0 %v727
    %1020 = vmatpush1.bf16.msra.mxu0 %v726
    %1021 = vmatprep.subr.bf16.mxu0 %v731
    %1022 = vmatpush1.bf16.msra.mxu0 %v730
    %1023 = vmatprep.subr.bf16.mxu0 %v735
    %1024 = vmatpush1.bf16.msra.mxu0 %v734
    %1025 = vmatprep.subr.bf16.mxu0 %v739
    %1026 = vmatpush1.bf16.msra.mxu0 %v738
    %1027 = vmatprep.subr.bf16.mxu0 %v743
    %1028 = vmatpush1.bf16.msra.mxu0 %v742
    %1029 = vmatprep.subr.bf16.mxu0 %v747
    %1030 = vmatpush1.bf16.msra.mxu0 %v746
    %1031 = vmatprep.mubr.bf16.mxu0 %v85
    %1032 = vmatmul.mubr.bf16.gmra.mrb[0].mxu0 %v84
    %v1033 = vpop.f32.mrb[0].mxu0
    %v1034 = vadd.f32 %v993, %v1033
    %v1035 = vpop.f32.mrb[0].mxu0
    %v1036 = vadd.f32 %v995, %v1035
    %v1037 = vpop.f32.mrb[0].mxu0
    %v1038 = vpop.f32.mrb[0].mxu0
    %1039 = vdwg.mxu0
    %v1040 = vmax.f32 %v952, 0.0
    %v1041 = vmax.f32 %v954, 0.0
    %v1042 = vmax.f32 %v1034, 0.0
    %v1043 = vmax.f32 %v1036, 0.0
    %v1044 = vpack.c.bf16 %v1040, %v1040
    %v1045 = vpack.c.bf16 %v1041, %v1041
    %v1046 = vpack.c.bf16 %v1042, %v1042
    %v1047 = vpack.c.bf16 %v1043, %v1043
    %v1048 = vld [vmem:[#allocation7] sm:$0xf]
    %v1049 = vld [vmem:[#allocation7 + $0x4] sm:$0xf]
    %v1050 = vld [vmem:[#allocation7 + $0x8] sm:$0xf]
    %v1051 = vld [vmem:[#allocation7 + $0xc] sm:$0xf]
    %v1052 = vld [vmem:[#allocation7 + $0x10] sm:$0xf]
    %v1053 = vld [vmem:[#allocation7 + $0x14] sm:$0xf]
    %v1054 = vld [vmem:[#allocation7 + $0x18] sm:$0xf]
    %v1055 = vld [vmem:[#allocation7 + $0x1c] sm:$0xf]
    %v1056 = vld [vmem:[#allocation7 + $0x20] sm:$0xf]
    %v1057 = vld [vmem:[#allocation7 + $0x24] sm:$0xf]
    %v1058 = vld [vmem:[#allocation7 + $0x28] sm:$0xf]
    %v1059 = vld [vmem:[#allocation7 + $0x2c] sm:$0xf]
    %v1060 = vld [vmem:[#allocation7 + $0x30] sm:$0xf]
    %v1061 = vld [vmem:[#allocation7 + $0x34] sm:$0xf]
    %v1062 = vld [vmem:[#allocation7 + $0x38] sm:$0xf]
    %v1063 = vld [vmem:[#allocation7 + $0x3c] sm:$0xf]
    %v1064 = vld [vmem:[#allocation7 + $0x40] sm:$0xf]
    %v1065 = vld [vmem:[#allocation7 + $0x44] sm:$0xf]
    %v1066 = vld [vmem:[#allocation7 + $0x48] sm:$0xf]
    %v1067 = vld [vmem:[#allocation7 + $0x4c] sm:$0xf]
    %v1068 = vld [vmem:[#allocation7 + $0x50] sm:$0xf]
    %v1069 = vld [vmem:[#allocation7 + $0x54] sm:$0xf]
    %v1070 = vld [vmem:[#allocation7 + $0x58] sm:$0xf]
    %v1071 = vld [vmem:[#allocation7 + $0x5c] sm:$0xf]
    %v1072 = vld [vmem:[#allocation7 + $0x60] sm:$0xf]
    %v1073 = vld [vmem:[#allocation7 + $0x64] sm:$0xf]
    %v1074 = vld [vmem:[#allocation7 + $0x68] sm:$0xf]
    %v1075 = vld [vmem:[#allocation7 + $0x6c] sm:$0xf]
    %v1076 = vld [vmem:[#allocation7 + $0x70] sm:$0xf]
    %v1077 = vld [vmem:[#allocation7 + $0x74] sm:$0xf]
    %v1078 = vld [vmem:[#allocation7 + $0x78] sm:$0xf]
    %v1079 = vld [vmem:[#allocation7 + $0x7c] sm:$0xf]
    %v1080 = vld [vmem:[#allocation7 + $0x80] sm:$0xf]
    %v1081 = vld [vmem:[#allocation7 + $0x84] sm:$0xf]
    %v1082 = vld [vmem:[#allocation7 + $0x88] sm:$0xf]
    %v1083 = vld [vmem:[#allocation7 + $0x8c] sm:$0xf]
    %v1084 = vld [vmem:[#allocation7 + $0x90] sm:$0xf]
    %v1085 = vld [vmem:[#allocation7 + $0x94] sm:$0xf]
    %v1086 = vld [vmem:[#allocation7 + $0x98] sm:$0xf]
    %v1087 = vld [vmem:[#allocation7 + $0x9c] sm:$0xf]
    %v1088 = vld [vmem:[#allocation7 + $0xa0] sm:$0xf]
    %v1089 = vld [vmem:[#allocation7 + $0xa4] sm:$0xf]
    %v1090 = vld [vmem:[#allocation7 + $0xa8] sm:$0xf]
    %v1091 = vld [vmem:[#allocation7 + $0xac] sm:$0xf]
    %v1092 = vld [vmem:[#allocation7 + $0xb0] sm:$0xf]
    %v1093 = vld [vmem:[#allocation7 + $0xb4] sm:$0xf]
    %v1094 = vld [vmem:[#allocation7 + $0xb8] sm:$0xf]
    %v1095 = vld [vmem:[#allocation7 + $0xbc] sm:$0xf]
    %v1096 = vld [vmem:[#allocation7 + $0xc0] sm:$0xf]
    %v1097 = vld [vmem:[#allocation7 + $0xc4] sm:$0xf]
    %v1098 = vld [vmem:[#allocation7 + $0xc8] sm:$0xf]
    %v1099 = vld [vmem:[#allocation7 + $0xcc] sm:$0xf]
    %v1100 = vld [vmem:[#allocation7 + $0xd0] sm:$0xf]
    %v1101 = vld [vmem:[#allocation7 + $0xd4] sm:$0xf]
    %v1102 = vld [vmem:[#allocation7 + $0xd8] sm:$0xf]
    %v1103 = vld [vmem:[#allocation7 + $0xdc] sm:$0xf]
    %v1104 = vld [vmem:[#allocation7 + $0xe0] sm:$0xf]
    %v1105 = vld [vmem:[#allocation7 + $0xe4] sm:$0xf]
    %v1106 = vld [vmem:[#allocation7 + $0xe8] sm:$0xf]
    %v1107 = vld [vmem:[#allocation7 + $0xec] sm:$0xf]
    %v1108 = vld [vmem:[#allocation7 + $0xf0] sm:$0xf]
    %v1109 = vld [vmem:[#allocation7 + $0xf4] sm:$0xf]
    %v1110 = vld [vmem:[#allocation7 + $0xf8] sm:$0xf]
    %v1111 = vld [vmem:[#allocation7 + $0xfc] sm:$0xf]
    %v1112 = vld [vmem:[%s4] sm:$0x1]
    %v1114 = vlaneseq
    %v1115 = vshrl.u32 %v1114, 7
    %v1116 = vsub.s32 0, %v1115
    %v1117 = vrot.slane %v1112, %v1116
    %v1183 = vunpack.c.l.b16 %v1048
    %v1184 = vunpack.c.l.b16 %v1049
    %v1185 = vunpack.c.l.b16 %v1050
    %v1186 = vunpack.c.l.b16 %v1051
    %v1187 = vunpack.c.l.b16 %v1052
    %v1188 = vunpack.c.l.b16 %v1053
    %v1189 = vunpack.c.l.b16 %v1054
    %v1190 = vunpack.c.l.b16 %v1055
    %v1191 = vunpack.c.l.b16 %v1056
    %v1192 = vunpack.c.l.b16 %v1057
    %v1193 = vunpack.c.l.b16 %v1058
    %v1194 = vunpack.c.l.b16 %v1059
    %v1195 = vunpack.c.l.b16 %v1060
    %v1196 = vunpack.c.l.b16 %v1061
    %v1197 = vunpack.c.l.b16 %v1062
    %v1198 = vunpack.c.l.b16 %v1063
    %v1199 = vunpack.c.l.b16 %v1064
    %v1200 = vunpack.c.l.b16 %v1065
    %v1201 = vunpack.c.l.b16 %v1066
    %v1202 = vunpack.c.l.b16 %v1067
    %v1203 = vunpack.c.l.b16 %v1068
    %v1204 = vunpack.c.l.b16 %v1069
    %v1205 = vunpack.c.l.b16 %v1070
    %v1206 = vunpack.c.l.b16 %v1071
    %v1207 = vunpack.c.l.b16 %v1072
    %v1208 = vunpack.c.l.b16 %v1073
    %v1209 = vunpack.c.l.b16 %v1074
    %v1210 = vunpack.c.l.b16 %v1075
    %v1211 = vunpack.c.l.b16 %v1076
    %v1212 = vunpack.c.l.b16 %v1077
    %v1213 = vunpack.c.l.b16 %v1078
    %v1214 = vunpack.c.l.b16 %v1079
    %v1215 = vunpack.c.l.b16 %v1080
    %v1216 = vunpack.c.l.b16 %v1081
    %v1217 = vunpack.c.l.b16 %v1082
    %v1218 = vunpack.c.l.b16 %v1083
    %v1219 = vunpack.c.l.b16 %v1084
    %v1220 = vunpack.c.l.b16 %v1085
    %v1221 = vunpack.c.l.b16 %v1086
    %v1222 = vunpack.c.l.b16 %v1087
    %v1223 = vunpack.c.l.b16 %v1088
    %v1224 = vunpack.c.l.b16 %v1089
    %v1225 = vunpack.c.l.b16 %v1090
    %v1226 = vunpack.c.l.b16 %v1091
    %v1227 = vunpack.c.l.b16 %v1092
    %v1228 = vunpack.c.l.b16 %v1093
    %v1229 = vunpack.c.l.b16 %v1094
    %v1230 = vunpack.c.l.b16 %v1095
    %v1231 = vunpack.c.l.b16 %v1096
    %v1232 = vunpack.c.l.b16 %v1097
    %v1233 = vunpack.c.l.b16 %v1098
    %v1234 = vunpack.c.l.b16 %v1099
    %v1235 = vunpack.c.l.b16 %v1100
    %v1236 = vunpack.c.l.b16 %v1101
    %v1237 = vunpack.c.l.b16 %v1102
    %v1238 = vunpack.c.l.b16 %v1103
    %v1239 = vunpack.c.l.b16 %v1104
    %v1240 = vunpack.c.l.b16 %v1105
    %v1241 = vunpack.c.l.b16 %v1106
    %v1242 = vunpack.c.l.b16 %v1107
    %v1243 = vunpack.c.l.b16 %v1108
    %v1244 = vunpack.c.l.b16 %v1109
    %v1245 = vunpack.c.l.b16 %v1110
    %v1246 = vunpack.c.l.b16 %v1111
    %v1247 = vpack.c.b16 %v1184, %v1183
    %v1248 = vpack.c.b16 %v1186, %v1185
    %v1249 = vpack.c.b16 %v1188, %v1187
    %v1250 = vpack.c.b16 %v1190, %v1189
    %v1251 = vpack.c.b16 %v1192, %v1191
    %v1252 = vpack.c.b16 %v1194, %v1193
    %v1253 = vpack.c.b16 %v1196, %v1195
    %v1254 = vpack.c.b16 %v1198, %v1197
    %v1255 = vpack.c.b16 %v1200, %v1199
    %v1256 = vpack.c.b16 %v1202, %v1201
    %v1257 = vpack.c.b16 %v1204, %v1203
    %v1258 = vpack.c.b16 %v1206, %v1205
    %v1259 = vpack.c.b16 %v1208, %v1207
    %v1260 = vpack.c.b16 %v1210, %v1209
    %v1261 = vpack.c.b16 %v1212, %v1211
    %v1262 = vpack.c.b16 %v1214, %v1213
    %v1263 = vpack.c.b16 %v1216, %v1215
    %v1264 = vpack.c.b16 %v1218, %v1217
    %v1265 = vpack.c.b16 %v1220, %v1219
    %v1266 = vpack.c.b16 %v1222, %v1221
    %v1267 = vpack.c.b16 %v1224, %v1223
    %v1268 = vpack.c.b16 %v1226, %v1225
    %v1269 = vpack.c.b16 %v1228, %v1227
    %v1270 = vpack.c.b16 %v1230, %v1229
    %v1271 = vpack.c.b16 %v1232, %v1231
    %v1272 = vpack.c.b16 %v1234, %v1233
    %v1273 = vpack.c.b16 %v1236, %v1235
    %v1274 = vpack.c.b16 %v1238, %v1237
    %v1275 = vpack.c.b16 %v1240, %v1239
    %v1276 = vpack.c.b16 %v1242, %v1241
    %v1277 = vpack.c.b16 %v1244, %v1243
    %v1278 = vpack.c.b16 %v1246, %v1245
    %1311 = vmatprep.subr.bf16.mxu0 0
    %1312 = vmatpush1.bf16.msra.mxu0 %v1247
    %1313 = vmatprep.subr.bf16.mxu0 0
    %1314 = vmatpush1.bf16.msra.mxu0 %v1248
    %1315 = vmatprep.subr.bf16.mxu0 0
    %1316 = vmatpush1.bf16.msra.mxu0 %v1249
    %1317 = vmatprep.subr.bf16.mxu0 0
    %1318 = vmatpush1.bf16.msra.mxu0 %v1250
    %1319 = vmatprep.subr.bf16.mxu0 0
    %1320 = vmatpush1.bf16.msra.mxu0 %v1251
    %1321 = vmatprep.subr.bf16.mxu0 0
    %1322 = vmatpush1.bf16.msra.mxu0 %v1252
    %1323 = vmatprep.subr.bf16.mxu0 0
    %1324 = vmatpush1.bf16.msra.mxu0 %v1253
    %1325 = vmatprep.subr.bf16.mxu0 0
    %1326 = vmatpush1.bf16.msra.mxu0 %v1254
    %1327 = vmatprep.subr.bf16.mxu0 0
    %1328 = vmatpush1.bf16.msra.mxu0 %v1255
    %1329 = vmatprep.subr.bf16.mxu0 0
    %1330 = vmatpush1.bf16.msra.mxu0 %v1256
    %1331 = vmatprep.subr.bf16.mxu0 0
    %1332 = vmatpush1.bf16.msra.mxu0 %v1257
    %1333 = vmatprep.subr.bf16.mxu0 0
    %1334 = vmatpush1.bf16.msra.mxu0 %v1258
    %1335 = vmatprep.subr.bf16.mxu0 0
    %1336 = vmatpush1.bf16.msra.mxu0 %v1259
    %1337 = vmatprep.subr.bf16.mxu0 0
    %1338 = vmatpush1.bf16.msra.mxu0 %v1260
    %1339 = vmatprep.subr.bf16.mxu0 0
    %1340 = vmatpush1.bf16.msra.mxu0 %v1261
    %1341 = vmatprep.subr.bf16.mxu0 0
    %1342 = vmatpush1.bf16.msra.mxu0 %v1262
    %1343 = vmatprep.mubr.bf16.mxu0 %v1045
    %1344 = vmatmul.mubr.bf16.gmra.mrb[0].mxu0 %v1044
    %v1345 = vpop.f32.mrb[0].mxu0
    %v1346 = vadd.f32 %v1117, %v1345
    %v1347 = vpop.f32.mrb[0].mxu0
    %v1348 = vpop.f32.mrb[0].mxu0
    %v1349 = vpop.f32.mrb[0].mxu0
    %1350 = vdwg.mxu0
    %1351 = vmatprep.subr.bf16.mxu0 0
    %1352 = vmatpush1.bf16.msra.mxu0 %v1263
    %1353 = vmatprep.subr.bf16.mxu0 0
    %1354 = vmatpush1.bf16.msra.mxu0 %v1264
    %1355 = vmatprep.subr.bf16.mxu0 0
    %1356 = vmatpush1.bf16.msra.mxu0 %v1265
    %1357 = vmatprep.subr.bf16.mxu0 0
    %1358 = vmatpush1.bf16.msra.mxu0 %v1266
    %1359 = vmatprep.subr.bf16.mxu0 0
    %1360 = vmatpush1.bf16.msra.mxu0 %v1267
    %1361 = vmatprep.subr.bf16.mxu0 0
    %1362 = vmatpush1.bf16.msra.mxu0 %v1268
    %1363 = vmatprep.subr.bf16.mxu0 0
    %1364 = vmatpush1.bf16.msra.mxu0 %v1269
    %1365 = vmatprep.subr.bf16.mxu0 0
    %1366 = vmatpush1.bf16.msra.mxu0 %v1270
    %1367 = vmatprep.subr.bf16.mxu0 0
    %1368 = vmatpush1.bf16.msra.mxu0 %v1271
    %1369 = vmatprep.subr.bf16.mxu0 0
    %1370 = vmatpush1.bf16.msra.mxu0 %v1272
    %1371 = vmatprep.subr.bf16.mxu0 0
    %1372 = vmatpush1.bf16.msra.mxu0 %v1273
    %1373 = vmatprep.subr.bf16.mxu0 0
    %1374 = vmatpush1.bf16.msra.mxu0 %v1274
    %1375 = vmatprep.subr.bf16.mxu0 0
    %1376 = vmatpush1.bf16.msra.mxu0 %v1275
    %1377 = vmatprep.subr.bf16.mxu0 0
    %1378 = vmatpush1.bf16.msra.mxu0 %v1276
    %1379 = vmatprep.subr.bf16.mxu0 0
    %1380 = vmatpush1.bf16.msra.mxu0 %v1277
    %1381 = vmatprep.subr.bf16.mxu0 0
    %1382 = vmatpush1.bf16.msra.mxu0 %v1278
    %1383 = vmatprep.mubr.bf16.mxu0 %v1047
    %1384 = vmatmul.mubr.bf16.gmra.mrb[0].mxu0 %v1046
    %v1385 = vpop.f32.mrb[0].mxu0
    %v1386 = vadd.f32 %v1346, %v1385
    %v1387 = vpop.f32.mrb[0].mxu0
    %v1388 = vpop.f32.mrb[0].mxu0
    %v1389 = vpop.f32.mrb[0].mxu0
    %1390 = vdwg.mxu0
    %1391 = vst [vmem:[#allocation8] sm:$0xff] %v1386
    // Predicated region
    $region34: #{tpu_custom_call.1} parent=1 // pred_check
      _
    $region35: #{tpu_custom_call.1} parent=1 // pred_check_branch
      %1393 = sbr.rel (0) target = $region37
    $region36: #{tpu_custom_call.1} parent=1 // pred_region
      %s1395 = ssub.s32 128, 128
      %1396 = vsyncadd [#allocation4], %s1395
      %s1398 = sshll.u32 [#allocation8], 4
      %s1399 = int_to_ptr.vmem [resolvable:$true] %s1398
      %1401 = dma.vmem_to_hbm [thread:$0]  %s1399, 128, %s5, [#allocation4]
    $region37: #{tpu_custom_call.1} parent=1 // pred_fallthru
      _
    // Predicated region
    $region38: #{tpu_custom_call.1} parent=1 // pred_check
      _
    $region39: #{tpu_custom_call.1} parent=1 // pred_check_branch
      %1403 = sbr.rel (0) target = $region41
    $region40: #{tpu_custom_call.1} parent=1 // pred_region
      %1404 = dma.done [#allocation4], 128
    $region41: #{tpu_custom_call.1} parent=1 // pred_fallthru
      _
    %1405 = vsyncpa [#allocation3], 1
    %1406 = vsyncpa [#allocation6], 1
    %1407 = vsyncpa [#allocation4], 1

</llo_original>
